<compile_context>
chip_gen: v7x
topology: tpu7x:2x2x1
jax: 0.10.0
libtpu: 0.0.40
codegen_flags: <defaults>
</compile_context>

<pallas_src>
import functools

import jax
import jax.numpy as jnp
from jax.experimental import pallas as pl
from jax.experimental.pallas import tpu as pltpu


def _cdiv(a, b):
    return -(-a // b)


def _vmem_capacity_bytes():
    """Physical VMEM per TensorCore; falls back to the v7x 64 MiB floor."""
    try:
        return int(pltpu.get_tpu_info().vmem_capacity_bytes)
    except Exception:
        return 64 * 1024 * 1024


def _num_tensorcores():
    """Best-effort TensorCore count of the default device (v7x megacore -> 2)."""
    try:
        nc = getattr(jax.devices()[0], "num_cores", None)
        if nc:
            return int(nc)
    except Exception:
        pass
    return 1


def _distill_loss_kernel(*refs, distillation_type, tau, total_b, steps,
                         n_tiles, need_mask):
    if distillation_type == 'none':
        logits_ref, labels_ref, res_ref, base_acc = refs
        teacher_ref = None
        kd_acc = None
    else:
        logits_ref, teacher_ref, labels_ref, res_ref, base_acc, kd_acc = refs

    c = pl.program_id(0)          # split / core axis ("parallel")
    i = pl.program_id(1)          # batch-tile axis ("arbitrary", reduction)

    @pl.when(i == 0)
    def _init():
        base_acc[...] = jnp.zeros_like(base_acc)
        if kd_acc is not None:
            kd_acc[...] = jnp.zeros_like(kd_acc)

    logits = logits_ref[...].astype(jnp.float32)          # (TB, C)
    tb, num_c = logits.shape

    tile = c * steps + i                                   # global (unclamped) tile idx
    tile_c = jnp.minimum(tile, n_tiles - 1) if n_tiles > 1 else tile

    # Labels are resident in VMEM (constant index_map => one DMA total); slice per tile.
    if n_tiles == 1:
        labels = labels_ref[...]                           # (TB, 1) int32
    else:
        start = pl.multiple_of(tile_c * tb, 8)
        labels = labels_ref[pl.ds(start, tb), :]           # (TB, 1) int32

    col = jax.lax.broadcasted_iota(jnp.int32, (tb, num_c), 1)

    if need_mask:
        row = jax.lax.broadcasted_iota(jnp.int32, (tb, 1), 0) + tile * tb
        valid = row < total_b
        vmask = lambda v: jnp.where(valid, v, 0.0)
    else:
        vmask = lambda v: v

    # ---- student softmax row scalars (shared by base CE, 'hard', 'soft' tau==1) ----
    m = jnp.max(logits, axis=1, keepdims=True)
    s = logits - m
    log_sum_e = jnp.log(jnp.sum(jnp.exp(s), axis=1, keepdims=True))

    # base cross entropy: -logp[label] = log(sum_e) - s[label]  (logp never built)
    s_lab = jnp.sum(jnp.where(col == labels, s, 0.0), axis=1, keepdims=True)
    base_acc[...] += vmask(log_sum_e - s_lab)

    if distillation_type == 'soft':
        teacher = teacher_ref[...].astype(jnp.float32)
        inv_t = 1.0 / tau
        if tau == 1.0:
            x = logits
            mx, log_sum_x = m, log_sum_e       # reuse the base-CE softmax scalars
            t_scaled = teacher
        else:
            x = logits * inv_t
            mx = jnp.max(x, axis=1, keepdims=True)
            log_sum_x = jnp.log(jnp.sum(jnp.exp(x - mx), axis=1, keepdims=True))
            t_scaled = teacher * inv_t
        mt = jnp.max(t_scaled, axis=1, keepdims=True)
        et = jnp.exp(t_scaled - mt)
        sum_et = jnp.sum(et, axis=1, keepdims=True)
        pt = et * pl.reciprocal(sum_et)        # exp(lt) without a second exp pass
        # kl_div(ls, lt, log_target=True, 'sum') per row, algebraically simplified:
        #   sum_c pt*(lt-ls) = sum_c pt*(t_scaled - x) + (mx - mt) + log_sum_x - log(sum_et)
        row_dot = jnp.sum(pt * (t_scaled - x), axis=1, keepdims=True)
        row_const = (mx - mt) + (log_sum_x - jnp.log(sum_et))
        kd_acc[...] += vmask(row_dot + row_const)
    elif distillation_type == 'hard':
        teacher = teacher_ref[...]             # native dtype: max/== are exact, no cast
        tmax = jnp.max(teacher, axis=1, keepdims=True)
        # argmax with first-match tie-breaking (like torch)
        t_lab = jnp.min(jnp.where(teacher == tmax, col, num_c), axis=1, keepdims=True)
        s_t = jnp.sum(jnp.where(col == t_lab, s, 0.0), axis=1, keepdims=True)
        kd_acc[...] += vmask(log_sum_e - s_t)

    @pl.when(i == steps - 1)
    def _finalize():
        sub = jax.lax.broadcasted_iota(jnp.int32, res_ref.shape, 0)
        res = jnp.where(sub == 0, jnp.sum(base_acc[...]), 0.0)
        if kd_acc is not None:
            res = jnp.where(sub == 1, jnp.sum(kd_acc[...]), res)
        res_ref[...] = res


def distill_loss(outputs, teacher_outputs, labels, *, distillation_type='soft',
                 alpha=0.5, tau=1.0, block_b=None, num_splits=None,
                 input_buffering=None):
    """outputs/teacher_outputs: [B, C] float logits (f32/bf16); labels: [B] int ids."""
    assert distillation_type in ('none', 'soft', 'hard')
    B, C = outputs.shape
    in_itemsize = jnp.dtype(outputs.dtype).itemsize

    vmem_cap = _vmem_capacity_bytes()
    # ~25% headroom below the per-generation physical VMEM (48 MiB v7x, 96 MiB v5e/v6e).
    vmem_limit = int(vmem_cap * 0.75)

    # ---- batch-tile sizing against the full working set ----
    if block_b is not None:
        tb = min(int(block_b), B)
    else:
        n_logit_inputs = 1 if distillation_type == 'none' else 2
        f32_temps = {'none': 5, 'hard': 7, 'soft': 11}[distillation_type]
        bytes_per_row = C * (n_logit_inputs * 2 * in_itemsize + f32_temps * 4)
        labels_resident = _cdiv(B + 1024, 8) * 8 * 128 * 4
        budget = max(vmem_limit - labels_resident - (2 << 20), 1 << 20)
        tb = min(budget // bytes_per_row, 1024, B)
        tb = max(tb, 1)
    if tb < B:
        row_align = {4: 8, 2: 16, 1: 32}.get(in_itemsize, 8)
        tb = max(row_align, (tb // row_align) * row_align)
        if tb >= B:
            tb = B
    # TODO(synk): for vocab-scale C (>=32k) also tile over C with an online logsumexp.

    n_tiles = _cdiv(B, tb)
    nsplit = num_splits if num_splits is not None else _num_tensorcores()
    nsplit = max(1, min(int(nsplit), n_tiles))
    steps = _cdiv(n_tiles, nsplit)
    need_mask = (B % tb != 0) or (nsplit * steps != n_tiles)

    # Labels padded to a whole number of tiles; resident in VMEM (single DMA).
    padded_b = n_tiles * tb
    labels_i32 = labels.astype(jnp.int32).reshape(B)
    if padded_b != B:
        labels_i32 = jnp.concatenate(
            [labels_i32, jnp.zeros((padded_b - B,), jnp.int32)])
    labels2d = labels_i32.reshape(padded_b, 1)

    if nsplit * steps == n_tiles:
        tile_map = lambda c, i: (c * steps + i, 0)
    else:  # clamp the last split's out-of-range tiles; their rows are masked out
        tile_map = lambda c, i: (jnp.minimum(c * steps + i, n_tiles - 1), 0)

    if input_buffering:  # e.g. 3 on v5e if the profile shows exposed DMA
        logit_spec = pl.BlockSpec((tb, C), tile_map,
                                  pipeline_mode=pl.Buffered(int(input_buffering)))
    else:
        logit_spec = pl.BlockSpec((tb, C), tile_map)

    in_specs = [logit_spec]
    inputs = [outputs]
    scratch = [pltpu.VMEM((tb, 1), jnp.float32)]
    if distillation_type != 'none':
        in_specs.append(logit_spec)
        inputs.append(teacher_outputs)
        scratch.append(pltpu.VMEM((tb, 1), jnp.float32))
    in_specs.append(pl.BlockSpec((padded_b, 1), lambda c, i: (0, 0)))
    inputs.append(labels2d)

    kernel = functools.partial(
        _distill_loss_kernel,
        distillation_type=distillation_type,
        tau=float(tau),
        total_b=B,
        steps=steps,
        n_tiles=n_tiles,
        need_mask=need_mask,
    )
    raw = pl.pallas_call(
        kernel,
        out_shape=jax.ShapeDtypeStruct((nsplit * 8, 128), jnp.float32),
        grid=(nsplit, steps),
        in_specs=in_specs,
        out_specs=pl.BlockSpec((8, 128), lambda c, i: (c, 0)),
        scratch_shapes=scratch,
        compiler_params=pltpu.CompilerParams(
            dimension_semantics=("parallel", "arbitrary"),
            vmem_limit_bytes=vmem_limit,
        ),
    )(*inputs)

    # Combine per-split partial sums and apply normalizations / alpha blend.
    raw = raw.reshape(nsplit, 8, 128)
    base_loss = jnp.sum(raw[:, 0, 0]) / B
    if distillation_type == 'none':
        return base_loss
    kd_sum = jnp.sum(raw[:, 1, 0])
    if distillation_type == 'soft':
        kd = kd_sum * (float(tau) * float(tau)) / (B * C)
    else:
        kd = kd_sum / B
    return base_loss * (1.0 - float(alpha)) + kd * float(alpha)


# ---------------- pure-JAX reference (for sanity checking) ----------------
def _ref_loss(outputs, teacher_outputs, labels, distillation_type, alpha, tau):
    B, C = outputs.shape
    outputs = outputs.astype(jnp.float32)
    teacher_outputs = teacher_outputs.astype(jnp.float32)
    logp = jax.nn.log_softmax(outputs, axis=1)
    base = -jnp.mean(jnp.take_along_axis(logp, labels[:, None], axis=1))
    if distillation_type == 'none':
        return base
    if distillation_type == 'soft':
        ls = jax.nn.log_softmax(outputs / tau, axis=1)
        lt = jax.nn.log_softmax(teacher_outputs / tau, axis=1)
        kd = jnp.sum(jnp.exp(lt) * (lt - ls)) * (tau * tau) / (B * C)
    else:
        t_lab = jnp.argmax(teacher_outputs, axis=1)
        kd = -jnp.mean(jnp.take_along_axis(logp, t_lab[:, None], axis=1))
    return base * (1 - alpha) + kd * alpha


if __name__ == "__main__":
    key = jax.random.PRNGKey(0)
    k1, k2, k3 = jax.random.split(key, 3)

    alpha, tau = 0.5, 2.0

    # 1) small single-tile case (auto tile -> full batch)
    B, C = 16, 32
    outputs = jax.random.normal(k1, (B, C), dtype=jnp.float32)
    teacher_outputs = jax.random.normal(k2, (B, C), dtype=jnp.float32)
    labels = jax.random.randint(k3, (B,), 0, C, dtype=jnp.int32)
    for dt in ('none', 'soft', 'hard'):
        got = jax.block_until_ready(
            distill_loss(outputs, teacher_outputs, labels,
                         distillation_type=dt, alpha=alpha, tau=tau))
        want = _ref_loss(outputs, teacher_outputs, labels, dt, alpha, tau)
        assert jnp.allclose(got, want, rtol=1e-4, atol=1e-5), (dt, got, want)

    # 2) batch-tiled, 2-way split, partial + over-range tiles, tau == 1 fast path
    B2, C2 = 20, 128
    o2 = jax.random.normal(k1, (B2, C2), dtype=jnp.float32)
    t2 = jax.random.normal(k2, (B2, C2), dtype=jnp.float32)
    l2 = jax.random.randint(k3, (B2,), 0, C2, dtype=jnp.int32)
    for dt in ('none', 'soft', 'hard'):
        got = jax.block_until_ready(
            distill_loss(o2, t2, l2, distillation_type=dt,
                         alpha=alpha, tau=1.0, block_b=8, num_splits=2))
        want = _ref_loss(o2, t2, l2, dt, alpha, 1.0)
        assert jnp.allclose(got, want, rtol=1e-4, atol=1e-5), (dt, got, want)

    # 3) bf16 logits stay bf16 in HBM (halved DMA traffic); tb multiple of 16
    o_bf = o2.astype(jnp.bfloat16)
    t_bf = t2.astype(jnp.bfloat16)
    got = jax.block_until_ready(
        distill_loss(o_bf, t_bf, l2, distillation_type='soft',
                     alpha=alpha, tau=tau, block_b=16))
    want = _ref_loss(o_bf, t_bf, l2, 'soft', alpha, tau)
    assert jnp.allclose(got, want, rtol=2e-3, atol=2e-3), (got, want)

    # 4) auto (VMEM-derived) tile sizing on a slightly larger problem
    B3, C3 = 300, 256
    o3 = jax.random.normal(k1, (B3, C3), dtype=jnp.float32)
    t3 = jax.random.normal(k2, (B3, C3), dtype=jnp.float32)
    l3 = jax.random.randint(k3, (B3,), 0, C3, dtype=jnp.int32)
    got = jax.block_until_ready(
        distill_loss(o3, t3, l3, distillation_type='soft', alpha=alpha, tau=tau))
    want = _ref_loss(o3, t3, l3, 'soft', alpha, tau)
    assert jnp.allclose(got, want, rtol=1e-4, atol=1e-5), (got, want)

    print("KERNEL_OK")
</pallas_src>

<mosaic_0001>
module attributes {stable_mosaic.version = 11 : i64} {
  func.func @_distill_loss_kernel(%arg0: i32, %arg1: i32, %arg2: memref<16x32xf32, #tpu.memory_space<vmem>>, %arg3: memref<16x1xi32, #tpu.memory_space<vmem>>, %arg4: memref<8x128xf32, #tpu.memory_space<vmem>>, %arg5: memref<16x1xf32, #tpu.memory_space<vmem>>) attributes {dimension_semantics = [#tpu.dimension_semantics<parallel>, #tpu.dimension_semantics<arbitrary>], iteration_bounds = array<i64: 1, 1>, scalar_prefetch = 0 : i64, scratch_operands = 1 : i64, tpu.core_type = #tpu.core_type<tc>, window_params = [{transform_indices = @transform_0, window_bounds = array<i64: 16, 32>}, {pipeline_mode = #tpu.pipeline_mode<synchronous>, transform_indices = @transform_1, window_bounds = array<i64: 16, 1>}, {transform_indices = @transform_2, window_bounds = array<i64: 8, 128>}]} {
    %c0_i32 = arith.constant 0 : i32
    %0 = arith.cmpi eq, %arg1, %c0_i32 : i32
    %1 = arith.extui %0 : i1 to i32
    %c0_i32_0 = arith.constant 0 : i32
    %2 = arith.cmpi ne, %1, %c0_i32_0 : i32
    scf.if %2 {
      %cst_13 = arith.constant 0.000000e+00 : f32
      %27 = vector.broadcast %cst_13 : f32 to vector<16x1xf32>
      %c0_14 = arith.constant 0 : index
      %c0_15 = arith.constant 0 : index
      %28 = vector.load %arg5[%c0_14, %c0_15] : memref<16x1xf32, #tpu.memory_space<vmem>>, vector<16x1xf32>
      tpu.vector_store %arg5[%c0_14, %c0_15], %27 {strides = array<i32>} : memref<16x1xf32, #tpu.memory_space<vmem>>, vector<16x1xf32>,
    } else {
    }
    %c0 = arith.constant 0 : index
    %c0_1 = arith.constant 0 : index
    %3 = vector.load %arg2[%c0, %c0_1] : memref<16x32xf32, #tpu.memory_space<vmem>>, vector<16x32xf32>
    %c0_2 = arith.constant 0 : index
    %c0_3 = arith.constant 0 : index
    %4 = vector.load %arg3[%c0_2, %c0_3] : memref<16x1xi32, #tpu.memory_space<vmem>>, vector<16x1xi32>
    %5 = tpu.iota {dimensions = array<i32: 1>} : vector<16x32xi32>
    %cst = arith.constant dense<0xFF800000> : vector<16xf32>
    %6 = vector.multi_reduction <maximumf>, %3, %cst [1] : vector<16x32xf32> to vector<16xf32>
    %7 = vector.shape_cast %6 : vector<16xf32> to vector<16x1xf32>
    %8 = vector.broadcast %7 : vector<16x1xf32> to vector<16x32xf32>
    %9 = arith.subf %3, %8 : vector<16x32xf32>
    %10 = math.exp %9 : vector<16x32xf32>
    %cst_4 = arith.constant dense<0.000000e+00> : vector<16xf32>
    %11 = vector.multi_reduction <add>, %10, %cst_4 [1] : vector<16x32xf32> to vector<16xf32>
    %12 = vector.shape_cast %11 : vector<16xf32> to vector<16x1xf32>
    %13 = math.log %12 : vector<16x1xf32>
    %14 = vector.broadcast %4 : vector<16x1xi32> to vector<16x32xi32>
    %15 = arith.cmpi eq, %5, %14 : vector<16x32xi32>
    %cst_5 = arith.constant 0.000000e+00 : f32
    %16 = vector.broadcast %cst_5 : f32 to vector<16x32xf32>
    %17 = arith.select %15, %9, %16 : vector<16x32xi1>, vector<16x32xf32>
    %cst_6 = arith.constant dense<0.000000e+00> : vector<16xf32>
    %18 = vector.multi_reduction <add>, %17, %cst_6 [1] : vector<16x32xf32> to vector<16xf32>
    %19 = vector.shape_cast %18 : vector<16xf32> to vector<16x1xf32>
    %c0_7 = arith.constant 0 : index
    %c0_8 = arith.constant 0 : index
    %20 = vector.load %arg5[%c0_7, %c0_8] : memref<16x1xf32, #tpu.memory_space<vmem>>, vector<16x1xf32>
    %21 = arith.subf %13, %19 : vector<16x1xf32>
    %22 = arith.addf %20, %21 : vector<16x1xf32>
    %c0_9 = arith.constant 0 : index
    %c0_10 = arith.constant 0 : index
    %23 = vector.load %arg5[%c0_9, %c0_10] : memref<16x1xf32, #tpu.memory_space<vmem>>, vector<16x1xf32>
    tpu.vector_store %arg5[%c0_9, %c0_10], %22 {strides = array<i32>} : memref<16x1xf32, #tpu.memory_space<vmem>>, vector<16x1xf32>,
    %c0_i32_11 = arith.constant 0 : i32
    %24 = arith.cmpi eq, %arg1, %c0_i32_11 : i32
    %25 = arith.extui %24 : i1 to i32
    %c0_i32_12 = arith.constant 0 : i32
    %26 = arith.cmpi ne, %25, %c0_i32_12 : i32
    scf.if %26 {
      %27 = tpu.iota {dimensions = array<i32: 0>} : vector<8x128xi32>
      %c0_i32_13 = arith.constant 0 : i32
      %28 = vector.broadcast %c0_i32_13 : i32 to vector<8x128xi32>
      %29 = arith.cmpi eq, %27, %28 : vector<8x128xi32>
      %c0_14 = arith.constant 0 : index
      %c0_15 = arith.constant 0 : index
      %30 = vector.load %arg5[%c0_14, %c0_15] : memref<16x1xf32, #tpu.memory_space<vmem>>, vector<16x1xf32>
      %31 = vector.shape_cast %30 : vector<16x1xf32> to vector<1x16x1xf32>
      %cst_16 = arith.constant dense<0.000000e+00> : vector<1xf32>
      %32 = vector.multi_reduction <add>, %31, %cst_16 [1, 2] : vector<1x16x1xf32> to vector<1xf32>
      %33 = vector.shape_cast %32 : vector<1xf32> to vector<1x1x1xf32>
      %34 = vector.extract %33[0, 0, 0] : f32 from vector<1x1x1xf32>
      %cst_17 = arith.constant 0.000000e+00 : f32
      %35 = vector.broadcast %34 : f32 to vector<8x128xf32>
      %36 = vector.broadcast %cst_17 : f32 to vector<8x128xf32>
      %37 = arith.select %29, %35, %36 : vector<8x128xi1>, vector<8x128xf32>
      %c0_18 = arith.constant 0 : index
      %c0_19 = arith.constant 0 : index
      %38 = vector.load %arg4[%c0_18, %c0_19] : memref<8x128xf32, #tpu.memory_space<vmem>>, vector<8x128xf32>
      tpu.vector_store %arg4[%c0_18, %c0_19], %37 {strides = array<i32>} : memref<8x128xf32, #tpu.memory_space<vmem>>, vector<8x128xf32>,
    } else {
    }
    return
  }
  func.func @transform_0(%arg0: i32, %arg1: i32) -> (i32, i32) {
    %c1_i32 = arith.constant 1 : i32
    %0 = arith.muli %arg0, %c1_i32 : i32
    %1 = arith.addi %0, %arg1 : i32
    %c0_i32 = arith.constant 0 : i32
    %c0_i32_0 = arith.constant 0 : i32
    return %1, %c0_i32 : i32, i32
  }
  func.func @transform_1(%arg0: i32, %arg1: i32) -> (i32, i32) {
    %c0_i32 = arith.constant 0 : i32
    %c0_i32_0 = arith.constant 0 : i32
    %c0_i32_1 = arith.constant 0 : i32
    return %c0_i32, %c0_i32_0 : i32, i32
  }
  func.func @transform_2(%arg0: i32, %arg1: i32) -> (i32, i32) {
    %c0_i32 = arith.constant 0 : i32
    %c0_i32_0 = arith.constant 0 : i32
    return %arg0, %c0_i32 : i32, i32
  }
}

</mosaic_0001>

<llo_original>
// kernel: tpu_custom_call.1
$region0: #{tpu_custom_call.1}
  #allocation0 [shape = 'u32[]', space=smem, size = 0x4, offset = 0x4, fixed_abs, tag = 'smem constant byte address 0x4 - core index']
  #allocation1 [shape = 'u32[144,128]{1,0:T(1,128)}', space=vmem, size = 0x12000, scoped, tag = 'internal scratch']
  #allocation2 [shape = 'f32[16,1]{1,0:T(8,128)}', space=vmem, size = 0x2000, scoped, tag = 'scratch operand']
  %s0 = inlined_call_operand.vmem [shape: f32[16,32], index: 0, kind: input, shape index: {}]
  %s1 = inlined_call_operand.vmem [shape: s32[16,1], index: 1, kind: input, shape index: {}]
  %s2 = inlined_call_operand.hbm [shape: f32[8,128], index: 2, kind: output, shape index: {}]
  %s3 = sld [smem:[#allocation0]]
  $region26: #{tpu_custom_call.1} parent=0
    _
  %s5 = ssub.s32 1, %s3
  %s6 = scalar_select 0, %s5, %s3
  $region1: #{tpu_custom_call.1} parent=0
    #allocation3 [shape = 'u8[4096]{0}', space=vmem, size = 0x1000, scoped, tag = 'output window, operand 0, single buffered']
    #allocation4 [shape = 's32[1]{0}', space=sflag, size = 0x4, scoped, tag = 'scoped memory for tpu_custom_call.1']
    %7 = vsyncpa [#allocation4], 0
    // Predicated region
    $region2: #{tpu_custom_call.1} parent=1 // pred_check
      _
    $region3: #{tpu_custom_call.1} parent=1 // pred_check_branch
      %9 = sbr.rel (0) target = $region5
    $region4: #{tpu_custom_call.1} parent=1 // pred_region
      %s10 = sadd.s32 0, 0
      %s11 = smul.u32 2, %s10
      %p12 = scmp.lt.s32.totalorder %s11, 1
      %s13 = scalar_select %p12, %s11, 1
      %s14 = smul.addr %s13, 8
      %s15 = scalar_lea.vmem %s0, %s14
      %s16 = sadd.s32 0, 0
      %s17 = smul.u32 2, %s16
    $region5: #{tpu_custom_call.1} parent=1 // pred_fallthru
      _
    // Predicated region
    $region6: #{tpu_custom_call.1} parent=1 // pred_check
      _
    $region7: #{tpu_custom_call.1} parent=1 // pred_check_branch
      %19 = sbr.rel (0) target = $region9
    $region8: #{tpu_custom_call.1} parent=1 // pred_region
      _
    $region9: #{tpu_custom_call.1} parent=1 // pred_fallthru
      _
    %s20 = sadd.s32 0, 0
    %s21 = smul.u32 2, %s20
    %p22 = scmp.lt.s32.totalorder %s21, 1
    %s23 = scalar_select %p22, %s21, 1
    %s24 = smul.addr %s23, 8
    %s25 = scalar_lea.vmem %s0, %s24
    %s26 = sadd.s32 0, 0
    %s27 = smul.u32 2, %s26
    %p28 = scmp.lt.s32.totalorder %s27, 1
    %s29 = scalar_select %p28, %s27, 1
    %s30 = smul.addr %s29, 8
    %s31 = scalar_lea.vmem %s0, %s30
    %s32 = sadd.s32 0, 0
    %s33 = smul.u32 2, %s32
    %p34 = scmp.eq.s32.totalorder 0, 0
    // Predicated region
    $region10: #{tpu_custom_call.1} parent=1 // pred_check
      %p35 = pneg %p34
    $region11: #{tpu_custom_call.1} parent=1 // pred_check_branch
      %37 = sbr.rel (%p35) target = $region13
    $region12: #{tpu_custom_call.1} parent=1 // pred_region
      %vm38 = vcmask 7168
      %39 = vst.msk [vmem:[#allocation2] sm:$0xff] %vm38, 0.0
      %40 = vst.msk [vmem:[#allocation2 + $0x8] sm:$0xff] %vm38, 0.0
    $region13: #{tpu_custom_call.1} parent=1 // pred_fallthru
      _
    %v41 = vld [vmem:[%s31] sm:$0xff]
    %v42 = vld [vmem:[%s31 + $0x8] sm:$0xff]
    %v43 = vld [vmem:[%s1] sm:$0xff]
    %v44 = vld [vmem:[%s1 + $0x8] sm:$0xff]
    %v45 = vlaneseq
    %v46 = vand.u32 %v45, 127
    %vm47 = vcmask 261120
    %v48 = vsel %vm47, %v41, -inf
    %49 = vmax.xlane.f32.xlu0 %v48
    %v50 = vpop.xlane.xlu0 %49
    %v51 = vsel %vm47, %v42, -inf
    %52 = vmax.xlane.f32.xlu0 %v51
    %v53 = vpop.xlane.xlu0 %52
    %v54 = vsub.f32 %v41, %v50
    %v55 = vsub.f32 %v42, %v53
    %v56 = vmul.f32 %v54, 1.442695
    %v57 = vpow.pop %v56
    %v58 = vmul.f32 %v55, 1.442695
    %v59 = vpow.pop %v58
    %v60 = vsel %vm47, %v57, 0.0
    %61 = vadd.xlane.f32.xlu0 %v60
    %v62 = vpop.xlane.xlu0 %61
    %v63 = vsel %vm47, %v59, 0.0
    %64 = vadd.xlane.f32.xlu0 %v63
    %v65 = vpop.xlane.xlu0 %64
    %v66 = vlog2.pop %v62
    %v67 = vmul.f32 %v66, 0.6931472
    %v68 = vlog2.pop %v65
    %v69 = vmul.f32 %v68, 0.6931472
    %70 = vset.pattern.permute.xlu0 0
    %71 = vperm.xlu0 %70, %v43
    %v72 = vpop.permute.xlu0 %71
    %73 = vset.pattern.permute.xlu0 0
    %74 = vperm.xlu0 %73, %v44
    %v75 = vpop.permute.xlu0 %74
    %vm76 = vcmp.eq.s32.totalorder %v46, %v72
    %vm77 = vcmp.eq.s32.totalorder %v46, %v75
    %v78 = vsel %vm76, %v54, 0.0
    %v79 = vsel %vm77, %v55, 0.0
    %v80 = vsel %vm47, %v78, 0.0
    %81 = vadd.xlane.f32.xlu0 %v80
    %v82 = vpop.xlane.xlu0 %81
    %v83 = vsel %vm47, %v79, 0.0
    %84 = vadd.xlane.f32.xlu0 %v83
    %v85 = vpop.xlane.xlu0 %84
    %v86 = vld [vmem:[#allocation2] sm:$0xff]
    %v87 = vld [vmem:[#allocation2 + $0x8] sm:$0xff]
    %v88 = vsub.f32 %v67, %v82
    %v89 = vsub.f32 %v69, %v85
    %v90 = vadd.f32 %v86, %v88
    %v91 = vadd.f32 %v87, %v89
    %vm92 = vcmask 7168
    %93 = vst.msk [vmem:[#allocation2] sm:$0xff] %vm92, %v90
    %94 = vst.msk [vmem:[#allocation2 + $0x8] sm:$0xff] %vm92, %v91
    // Predicated region
    $region14: #{tpu_custom_call.1} parent=1 // pred_check
      %p95 = pneg %p34
    $region15: #{tpu_custom_call.1} parent=1 // pred_check_branch
      %97 = sbr.rel (%p95) target = $region17
    $region16: #{tpu_custom_call.1} parent=1 // pred_region
      %v98 = vlaneseq
      %v99 = vshrl.u32 %v98, 7
      %vm100 = vcmp.eq.s32.totalorder %v99, 0
      %v101 = vld [vmem:[#allocation2] sm:$0xff]
      %v102 = vld [vmem:[#allocation2 + $0x8] sm:$0xff]
      %v103 = vsel %vm92, %v101, 0.0
      %v104 = vsel %vm92, %v102, 0.0
      %v105 = vadd.f32 %v103, %v104
      %106 = vadd.xlane.f32.xlu0 %v105
      %v107 = vpop.xlane.xlu0 %106
      %v108 = vrot.slane %v107, 4
      %v109 = vadd.f32 %v107, %v108
      %v110 = vrot.slane %v109, 2
      %v111 = vadd.f32 %v109, %v110
      %v112 = vrot.slane %v111, 1
      %v113 = vadd.f32 %v111, %v112
      %s114 = vtos %v113
      %v115 = vstv %s114
      %v116 = vsel %vm100, %v115, 0.0
      %117 = vst [vmem:[#allocation3] sm:$0xff] %v116
    $region17: #{tpu_custom_call.1} parent=1 // pred_fallthru
      _
    // Predicated region
    $region18: #{tpu_custom_call.1} parent=1 // pred_check
      _
    $region19: #{tpu_custom_call.1} parent=1 // pred_check_branch
      %119 = sbr.rel (0) target = $region21
    $region20: #{tpu_custom_call.1} parent=1 // pred_region
      %s121 = ssub.s32 128, 128
      %122 = vsyncadd [#allocation4], %s121
      %s124 = sshll.u32 [#allocation3], 4
      %s125 = int_to_ptr.vmem [resolvable:$true] %s124
      %127 = dma.vmem_to_hbm [thread:$0]  %s125, 128, %s2, [#allocation4]
    $region21: #{tpu_custom_call.1} parent=1 // pred_fallthru
      _
    // Predicated region
    $region22: #{tpu_custom_call.1} parent=1 // pred_check
      _
    $region23: #{tpu_custom_call.1} parent=1 // pred_check_branch
      %129 = sbr.rel (0) target = $region25
    $region24: #{tpu_custom_call.1} parent=1 // pred_region
      %130 = dma.done [#allocation4], 128
    $region25: #{tpu_custom_call.1} parent=1 // pred_fallthru
      _
    %131 = vsyncpa [#allocation4], 1

</llo_original>
